<compile_context>
chip_gen: v5e
topology: v5e:2x2
jax: 0.10.0
libtpu: 0.0.40
codegen_flags: <defaults>
</compile_context>

<pallas_src>
import math

import jax
import jax.numpy as jnp
from jax import lax
from jax.experimental import pallas as pl
from jax.experimental.pallas import tpu as pltpu


def _make_attention_kernel(n_head: int, head_size: int, n_embd: int):
    scale = 1.0 / math.sqrt(head_size)
    c = n_embd

    def kernel(x_ref, w_ref, b_ref, o_ref):
        # x_ref: (T, C); w_ref: (C, 3C); b_ref: (1, 3C); o_ref: (T, C)
        cdt = x_ref.dtype  # compute dtype for MXU operands (bf16 stays bf16)

        x = x_ref[...]                       # (T, C), input dtype
        w = w_ref[...]                       # (C, 3C), input dtype

        # Fused Q/K/V projection: one wide matmul with f32 accumulation.
        qkv = jnp.dot(x, w, preferred_element_type=jnp.float32)      # (T, 3C) f32
        qkv = qkv + b_ref[...].astype(jnp.float32)                   # (1,3C) bcast

        # Slice Q/K/V at C-aligned offsets; fold the softmax scale into Q once.
        q = (qkv[:, 0:c] * scale).astype(cdt)                        # (T, C)
        k = qkv[:, c:2 * c].astype(cdt)                              # (T, C)
        v = qkv[:, 2 * c:3 * c].astype(cdt)                          # (T, C)

        # Per-head scaled dot-product attention. Head outputs are collected
        # and written back as ONE lane-dense (T, C) store at the end,
        # reproducing exactly:
        #   view(b,t,h,hs).transpose(1,2) -> sdpa -> transpose(1,2).reshape(b,t,c)
        ys = []
        for h in range(n_head):
            lo = h * head_size
            hi = lo + head_size
            q_h = q[:, lo:hi]                                        # (T, hs)
            k_h = k[:, lo:hi]                                        # (T, hs)
            v_h = v[:, lo:hi]                                        # (T, hs)

            # scores[i, j] = q_i . k_j   (contract last dims, no explicit .T)
            scores = lax.dot_general(
                q_h, k_h,
                dimension_numbers=(((1,), (1,)), ((), ())),
                preferred_element_type=jnp.float32)                  # (T, T) f32

            # Numerically-stable softmax over the key axis.
            scores = scores - jnp.max(scores, axis=-1, keepdims=True)
            p = jnp.exp(scores)
            denom = jnp.sum(p, axis=-1, keepdims=True)
            p = p * pl.reciprocal(denom, approx=True)

            # PV matmul in the input dtype with f32 accumulation.
            y_h = jnp.dot(p.astype(cdt), v_h,
                          preferred_element_type=jnp.float32)        # (T, hs) f32
            ys.append(y_h)

        # Single full-width write: (T, C) = concat of all heads along lanes.
        o_ref[...] = jnp.concatenate(ys, axis=-1).astype(o_ref.dtype)

    return kernel


def bert_sdpa_self_attention(x, wq, wk, wv, bq, bk, bv, *, n_head: int):
    """x: (B, T, C); wq/wk/wv: (C, C) with y = x @ W + b; bq/bk/bv: (C,)."""
    b, t, c = x.shape
    assert c % n_head == 0
    head_size = c // n_head

    # Fuse the three projections into one (C, 3C) weight / (1, 3C) bias.
    w_qkv = jnp.concatenate([wq, wk, wv], axis=1)                    # (C, 3C)
    b_qkv = jnp.concatenate([bq, bk, bv]).reshape(1, 3 * c)          # (1, 3C)

    kernel = _make_attention_kernel(n_head, head_size, c)

    return pl.pallas_call(
        kernel,
        out_shape=jax.ShapeDtypeStruct((b, t, c), x.dtype),
        grid_spec=pltpu.PrefetchScalarGridSpec(
            num_scalar_prefetch=0,
            grid=(b,),
            in_specs=[
                # x: squeeze the size-1 batch dim out of the kernel block.
                pl.BlockSpec((None, t, c), lambda i: (i, 0, 0)),
                # fused qkv weight / bias: constant index map (resident).
                pl.BlockSpec((c, 3 * c), lambda i: (0, 0)),
                pl.BlockSpec((1, 3 * c), lambda i: (0, 0)),
            ],
            out_specs=pl.BlockSpec((None, t, c), lambda i: (i, 0, 0)),
        ),
        compiler_params=pltpu.CompilerParams(
            dimension_semantics=("parallel",),
            vmem_limit_bytes=32 * 1024 * 1024,
        ),
    )(x, w_qkv, b_qkv)


def reference_attention(x, wq, wk, wv, bq, bk, bv, *, n_head: int):
    """Pure-JAX reference mirroring the PyTorch forward."""
    b, t, c = x.shape
    hs = c // n_head
    q = (x @ wq + bq).reshape(b, t, n_head, hs).transpose(0, 2, 1, 3)
    k = (x @ wk + bk).reshape(b, t, n_head, hs).transpose(0, 2, 1, 3)
    v = (x @ wv + bv).reshape(b, t, n_head, hs).transpose(0, 2, 1, 3)
    scores = jnp.einsum("bhqd,bhkd->bhqk", q, k) / math.sqrt(hs)
    p = jax.nn.softmax(scores, axis=-1)
    y = jnp.einsum("bhqk,bhkd->bhqd", p, v)
    return y.transpose(0, 2, 1, 3).reshape(b, t, c)


if __name__ == "__main__":
    # Small config consistent with the module: n_embd divisible by n_head.
    B, T, C = 2, 8, 32
    N_HEAD = 4

    key = jax.random.PRNGKey(0)
    kx, kq, kk, kv, kbq, kbk, kbv = jax.random.split(key, 7)

    x = jax.random.normal(kx, (B, T, C), dtype=jnp.float32)

    # Deterministic parameter init (nn.Linear-style uniform bound 1/sqrt(C)).
    bound = 1.0 / math.sqrt(C)
    wq = jax.random.uniform(kq, (C, C), jnp.float32, -bound, bound)
    wk = jax.random.uniform(kk, (C, C), jnp.float32, -bound, bound)
    wv = jax.random.uniform(kv, (C, C), jnp.float32, -bound, bound)
    bq = jax.random.uniform(kbq, (C,), jnp.float32, -bound, bound)
    bk = jax.random.uniform(kbk, (C,), jnp.float32, -bound, bound)
    bv = jax.random.uniform(kbv, (C,), jnp.float32, -bound, bound)

    out = bert_sdpa_self_attention(x, wq, wk, wv, bq, bk, bv, n_head=N_HEAD)
    out = jax.block_until_ready(out)

    ref = reference_attention(x, wq, wk, wv, bq, bk, bv, n_head=N_HEAD)
    assert out.shape == (B, T, C)
    # Tolerance accounts for pl.reciprocal(approx=True) in the softmax denom.
    assert jnp.allclose(out, ref, atol=5e-3, rtol=5e-3), (
        f"max abs err = {jnp.max(jnp.abs(out - ref))}")

    print("KERNEL_OK")
</pallas_src>

<mosaic_0001>
module attributes {stable_mosaic.version = 11 : i64} {
  func.func @kernel(%arg0: i32, %arg1: memref<1x8x32xf32, #tpu.memory_space<vmem>>, %arg2: memref<32x96xf32, #tpu.memory_space<vmem>>, %arg3: memref<1x96xf32, #tpu.memory_space<vmem>>, %arg4: memref<1x8x32xf32, #tpu.memory_space<vmem>>) attributes {dimension_semantics = [#tpu.dimension_semantics<parallel>], iteration_bounds = array<i64: 2>, scalar_prefetch = 0 : i64, scratch_operands = 0 : i64, tpu.core_type = #tpu.core_type<tc>, window_params = [{transform_indices = @transform_0, window_bounds = array<i64: 1, 8, 32>}, {pipeline_mode = #tpu.pipeline_mode<synchronous>, transform_indices = @transform_1, window_bounds = array<i64: 32, 96>}, {pipeline_mode = #tpu.pipeline_mode<synchronous>, transform_indices = @transform_2, window_bounds = array<i64: 1, 96>}, {transform_indices = @transform_3, window_bounds = array<i64: 1, 8, 32>}]} {
    %c0 = arith.constant 0 : index
    %c0_0 = arith.constant 0 : index
    %c0_1 = arith.constant 0 : index
    %0 = vector.load %arg1[%c0, %c0_0, %c0_1] : memref<1x8x32xf32, #tpu.memory_space<vmem>>, vector<1x8x32xf32>
    %1 = vector.shape_cast %0 : vector<1x8x32xf32> to vector<8x32xf32>
    %c0_2 = arith.constant 0 : index
    %c0_3 = arith.constant 0 : index
    %2 = vector.load %arg2[%c0_2, %c0_3] : memref<32x96xf32, #tpu.memory_space<vmem>>, vector<32x96xf32>
    %cst = arith.constant dense<0.000000e+00> : vector<8x96xf32>
    %3 = tpu.matmul %1, %2, %cst {dimension_numbers = #tpu.dot_dimension_numbers<[1], [0], [0], [1], [0, 0, 1, 1], [], []>} : vector<8x32xf32>, vector<32x96xf32>, vector<8x96xf32> -> vector<8x96xf32>
    %c0_4 = arith.constant 0 : index
    %c0_5 = arith.constant 0 : index
    %4 = vector.load %arg3[%c0_4, %c0_5] : memref<1x96xf32, #tpu.memory_space<vmem>>, vector<1x96xf32>
    %5 = vector.broadcast %4 : vector<1x96xf32> to vector<8x96xf32>
    %6 = arith.addf %3, %5 : vector<8x96xf32>
    %7 = vector.extract_strided_slice %6 {offsets = [0, 0], sizes = [8, 32], strides = [1, 1]} : vector<8x96xf32> to vector<8x32xf32>
    %cst_6 = arith.constant 0.353553385 : f32
    %8 = vector.broadcast %cst_6 : f32 to vector<8x32xf32>
    %9 = arith.mulf %7, %8 : vector<8x32xf32>
    %10 = vector.extract_strided_slice %6 {offsets = [0, 32], sizes = [8, 32], strides = [1, 1]} : vector<8x96xf32> to vector<8x32xf32>
    %11 = vector.extract_strided_slice %6 {offsets = [0, 64], sizes = [8, 32], strides = [1, 1]} : vector<8x96xf32> to vector<8x32xf32>
    %12 = vector.extract_strided_slice %9 {offsets = [0, 0], sizes = [8, 8], strides = [1, 1]} : vector<8x32xf32> to vector<8x8xf32>
    %13 = vector.extract_strided_slice %10 {offsets = [0, 0], sizes = [8, 8], strides = [1, 1]} : vector<8x32xf32> to vector<8x8xf32>
    %14 = vector.extract_strided_slice %11 {offsets = [0, 0], sizes = [8, 8], strides = [1, 1]} : vector<8x32xf32> to vector<8x8xf32>
    %cst_7 = arith.constant dense<0.000000e+00> : vector<8x8xf32>
    %15 = tpu.matmul %12, %13, %cst_7 {dimension_numbers = #tpu.dot_dimension_numbers<[1], [1], [0], [0], [0, 0, 1, 0], [], []>} : vector<8x8xf32>, vector<8x8xf32>, vector<8x8xf32> -> vector<8x8xf32>
    %cst_8 = arith.constant dense<0xFF800000> : vector<8xf32>
    %16 = vector.multi_reduction <maximumf>, %15, %cst_8 [1] : vector<8x8xf32> to vector<8xf32>
    %17 = vector.shape_cast %16 : vector<8xf32> to vector<8x1xf32>
    %18 = vector.broadcast %17 : vector<8x1xf32> to vector<8x8xf32>
    %19 = arith.subf %15, %18 : vector<8x8xf32>
    %20 = math.exp %19 : vector<8x8xf32>
    %cst_9 = arith.constant dense<0.000000e+00> : vector<8xf32>
    %21 = vector.multi_reduction <add>, %20, %cst_9 [1] : vector<8x8xf32> to vector<8xf32>
    %22 = vector.shape_cast %21 : vector<8xf32> to vector<8x1xf32>
    %23 = tpu.reciprocal %22 {approx = true} : vector<8x1xf32> -> vector<8x1xf32>
    %24 = vector.broadcast %23 : vector<8x1xf32> to vector<8x8xf32>
    %25 = arith.mulf %20, %24 : vector<8x8xf32>
    %cst_10 = arith.constant dense<0.000000e+00> : vector<8x8xf32>
    %26 = tpu.matmul %25, %14, %cst_10 {dimension_numbers = #tpu.dot_dimension_numbers<[1], [0], [0], [1], [0, 0, 1, 1], [], []>} : vector<8x8xf32>, vector<8x8xf32>, vector<8x8xf32> -> vector<8x8xf32>
    %27 = vector.extract_strided_slice %9 {offsets = [0, 8], sizes = [8, 8], strides = [1, 1]} : vector<8x32xf32> to vector<8x8xf32>
    %28 = vector.extract_strided_slice %10 {offsets = [0, 8], sizes = [8, 8], strides = [1, 1]} : vector<8x32xf32> to vector<8x8xf32>
    %29 = vector.extract_strided_slice %11 {offsets = [0, 8], sizes = [8, 8], strides = [1, 1]} : vector<8x32xf32> to vector<8x8xf32>
    %cst_11 = arith.constant dense<0.000000e+00> : vector<8x8xf32>
    %30 = tpu.matmul %27, %28, %cst_11 {dimension_numbers = #tpu.dot_dimension_numbers<[1], [1], [0], [0], [0, 0, 1, 0], [], []>} : vector<8x8xf32>, vector<8x8xf32>, vector<8x8xf32> -> vector<8x8xf32>
    %cst_12 = arith.constant dense<0xFF800000> : vector<8xf32>
    %31 = vector.multi_reduction <maximumf>, %30, %cst_12 [1] : vector<8x8xf32> to vector<8xf32>
    %32 = vector.shape_cast %31 : vector<8xf32> to vector<8x1xf32>
    %33 = vector.broadcast %32 : vector<8x1xf32> to vector<8x8xf32>
    %34 = arith.subf %30, %33 : vector<8x8xf32>
    %35 = math.exp %34 : vector<8x8xf32>
    %cst_13 = arith.constant dense<0.000000e+00> : vector<8xf32>
    %36 = vector.multi_reduction <add>, %35, %cst_13 [1] : vector<8x8xf32> to vector<8xf32>
    %37 = vector.shape_cast %36 : vector<8xf32> to vector<8x1xf32>
    %38 = tpu.reciprocal %37 {approx = true} : vector<8x1xf32> -> vector<8x1xf32>
    %39 = vector.broadcast %38 : vector<8x1xf32> to vector<8x8xf32>
    %40 = arith.mulf %35, %39 : vector<8x8xf32>
    %cst_14 = arith.constant dense<0.000000e+00> : vector<8x8xf32>
    %41 = tpu.matmul %40, %29, %cst_14 {dimension_numbers = #tpu.dot_dimension_numbers<[1], [0], [0], [1], [0, 0, 1, 1], [], []>} : vector<8x8xf32>, vector<8x8xf32>, vector<8x8xf32> -> vector<8x8xf32>
    %42 = vector.extract_strided_slice %9 {offsets = [0, 16], sizes = [8, 8], strides = [1, 1]} : vector<8x32xf32> to vector<8x8xf32>
    %43 = vector.extract_strided_slice %10 {offsets = [0, 16], sizes = [8, 8], strides = [1, 1]} : vector<8x32xf32> to vector<8x8xf32>
    %44 = vector.extract_strided_slice %11 {offsets = [0, 16], sizes = [8, 8], strides = [1, 1]} : vector<8x32xf32> to vector<8x8xf32>
    %cst_15 = arith.constant dense<0.000000e+00> : vector<8x8xf32>
    %45 = tpu.matmul %42, %43, %cst_15 {dimension_numbers = #tpu.dot_dimension_numbers<[1], [1], [0], [0], [0, 0, 1, 0], [], []>} : vector<8x8xf32>, vector<8x8xf32>, vector<8x8xf32> -> vector<8x8xf32>
    %cst_16 = arith.constant dense<0xFF800000> : vector<8xf32>
    %46 = vector.multi_reduction <maximumf>, %45, %cst_16 [1] : vector<8x8xf32> to vector<8xf32>
    %47 = vector.shape_cast %46 : vector<8xf32> to vector<8x1xf32>
    %48 = vector.broadcast %47 : vector<8x1xf32> to vector<8x8xf32>
    %49 = arith.subf %45, %48 : vector<8x8xf32>
    %50 = math.exp %49 : vector<8x8xf32>
    %cst_17 = arith.constant dense<0.000000e+00> : vector<8xf32>
    %51 = vector.multi_reduction <add>, %50, %cst_17 [1] : vector<8x8xf32> to vector<8xf32>
    %52 = vector.shape_cast %51 : vector<8xf32> to vector<8x1xf32>
    %53 = tpu.reciprocal %52 {approx = true} : vector<8x1xf32> -> vector<8x1xf32>
    %54 = vector.broadcast %53 : vector<8x1xf32> to vector<8x8xf32>
    %55 = arith.mulf %50, %54 : vector<8x8xf32>
    %cst_18 = arith.constant dense<0.000000e+00> : vector<8x8xf32>
    %56 = tpu.matmul %55, %44, %cst_18 {dimension_numbers = #tpu.dot_dimension_numbers<[1], [0], [0], [1], [0, 0, 1, 1], [], []>} : vector<8x8xf32>, vector<8x8xf32>, vector<8x8xf32> -> vector<8x8xf32>
    %57 = vector.extract_strided_slice %9 {offsets = [0, 24], sizes = [8, 8], strides = [1, 1]} : vector<8x32xf32> to vector<8x8xf32>
    %58 = vector.extract_strided_slice %10 {offsets = [0, 24], sizes = [8, 8], strides = [1, 1]} : vector<8x32xf32> to vector<8x8xf32>
    %59 = vector.extract_strided_slice %11 {offsets = [0, 24], sizes = [8, 8], strides = [1, 1]} : vector<8x32xf32> to vector<8x8xf32>
    %cst_19 = arith.constant dense<0.000000e+00> : vector<8x8xf32>
    %60 = tpu.matmul %57, %58, %cst_19 {dimension_numbers = #tpu.dot_dimension_numbers<[1], [1], [0], [0], [0, 0, 1, 0], [], []>} : vector<8x8xf32>, vector<8x8xf32>, vector<8x8xf32> -> vector<8x8xf32>
    %cst_20 = arith.constant dense<0xFF800000> : vector<8xf32>
    %61 = vector.multi_reduction <maximumf>, %60, %cst_20 [1] : vector<8x8xf32> to vector<8xf32>
    %62 = vector.shape_cast %61 : vector<8xf32> to vector<8x1xf32>
    %63 = vector.broadcast %62 : vector<8x1xf32> to vector<8x8xf32>
    %64 = arith.subf %60, %63 : vector<8x8xf32>
    %65 = math.exp %64 : vector<8x8xf32>
    %cst_21 = arith.constant dense<0.000000e+00> : vector<8xf32>
    %66 = vector.multi_reduction <add>, %65, %cst_21 [1] : vector<8x8xf32> to vector<8xf32>
    %67 = vector.shape_cast %66 : vector<8xf32> to vector<8x1xf32>
    %68 = tpu.reciprocal %67 {approx = true} : vector<8x1xf32> -> vector<8x1xf32>
    %69 = vector.broadcast %68 : vector<8x1xf32> to vector<8x8xf32>
    %70 = arith.mulf %65, %69 : vector<8x8xf32>
    %cst_22 = arith.constant dense<0.000000e+00> : vector<8x8xf32>
    %71 = tpu.matmul %70, %59, %cst_22 {dimension_numbers = #tpu.dot_dimension_numbers<[1], [0], [0], [1], [0, 0, 1, 1], [], []>} : vector<8x8xf32>, vector<8x8xf32>, vector<8x8xf32> -> vector<8x8xf32>
    %72 = tpu.concatenate %26, %41, %56, %71 in 1 : vector<8x8xf32>, vector<8x8xf32>, vector<8x8xf32>, vector<8x8xf32> -> vector<8x32xf32>
    %c0_23 = arith.constant 0 : index
    %c0_24 = arith.constant 0 : index
    %c0_25 = arith.constant 0 : index
    %73 = vector.load %arg4[%c0_23, %c0_24, %c0_25] : memref<1x8x32xf32, #tpu.memory_space<vmem>>, vector<1x8x32xf32>
    %74 = vector.shape_cast %73 : vector<1x8x32xf32> to vector<8x32xf32>
    %75 = vector.shape_cast %72 : vector<8x32xf32> to vector<1x8x32xf32>
    tpu.vector_store %arg4[%c0_23, %c0_24, %c0_25], %75 {strides = array<i32>} : memref<1x8x32xf32, #tpu.memory_space<vmem>>, vector<1x8x32xf32>,
    return
  }
  func.func @transform_0(%arg0: i32) -> (i32, i32, i32) {
    %c0_i32 = arith.constant 0 : i32
    %c0_i32_0 = arith.constant 0 : i32
    %c0_i32_1 = arith.constant 0 : i32
    return %arg0, %c0_i32, %c0_i32_0 : i32, i32, i32
  }
  func.func @transform_1(%arg0: i32) -> (i32, i32) {
    %c0_i32 = arith.constant 0 : i32
    %c0_i32_0 = arith.constant 0 : i32
    %c0_i32_1 = arith.constant 0 : i32
    return %c0_i32, %c0_i32_0 : i32, i32
  }
  func.func @transform_2(%arg0: i32) -> (i32, i32) {
    %c0_i32 = arith.constant 0 : i32
    %c0_i32_0 = arith.constant 0 : i32
    %c0_i32_1 = arith.constant 0 : i32
    return %c0_i32, %c0_i32_0 : i32, i32
  }
  func.func @transform_3(%arg0: i32) -> (i32, i32, i32) {
    %c0_i32 = arith.constant 0 : i32
    %c0_i32_0 = arith.constant 0 : i32
    %c0_i32_1 = arith.constant 0 : i32
    return %arg0, %c0_i32, %c0_i32_0 : i32, i32, i32
  }
}

</mosaic_0001>

<llo_original>
// kernel: tpu_custom_call.1
$region0: #{tpu_custom_call.1}
  #allocation0 [shape = 'u32[]', space=smem, size = 0x4, offset = 0x4, fixed_abs, tag = 'smem constant byte address 0x4 - core index']
  #allocation1 [shape = 'u32[72,128]{1,0:T(1,128)}', space=vmem, size = 0x9000, scoped, tag = 'internal scratch']
  %s0 = inlined_call_operand.hbm [shape: f32[2,8,32], index: 0, kind: input, shape index: {}]
  %s1 = inlined_call_operand.hbm [shape: f32[32,96], index: 1, kind: input, shape index: {}]
  %s2 = inlined_call_operand.vmem [shape: f32[1,96], index: 2, kind: input, shape index: {}]
  %s3 = inlined_call_operand.hbm [shape: f32[2,8,32], index: 3, kind: output, shape index: {}]
  %s4 = sld [smem:[#allocation0]]
  $region53: #{tpu_custom_call.1} parent=0
    _
  %s6 = ssub.s32 1, %s4
  %s7 = scalar_select 0, %s6, %s4
  $region1: #{tpu_custom_call.1} parent=0
    #allocation2 [shape = 'u8[8192]{0}', space=vmem, size = 0x2000, scoped, tag = 'input window, operand 0']
    #allocation3 [shape = 's32[2]{0}', space=sflag, size = 0x8, scoped, tag = 'scoped memory for tpu_custom_call.1']
    #allocation4 [shape = 's32[2]{0}', space=sflag, size = 0x8, scoped, tag = 'scoped memory for tpu_custom_call.1']
    #allocation5 [shape = 'u8[16384]{0}', space=vmem, size = 0x4000, scoped, tag = 'input window, operand 1, single buffered']
    #allocation6 [shape = 's32[1]{0}', space=sflag, size = 0x4, scoped, tag = 'scoped memory for tpu_custom_call.1']
    #allocation7 [shape = 'u8[8192]{0}', space=vmem, size = 0x2000, scoped, tag = 'output window, operand 0']
    %8 = vsyncpa [#allocation3], 0
    %s9 = scalar_lea.sflag [#allocation3], 1
    %10 = vsyncpa %s9, 0
    %11 = vsyncpa [#allocation6], 0
    %12 = vsyncpa [#allocation4], 0
    %s13 = scalar_lea.sflag [#allocation4], 1
    %14 = vsyncpa %s13, 0
    loop: start=0, step=1, limit=4
    $region2: #{tpu_custom_call.1} parent=1 // loop_pre_header
      _
    $region3: #{tpu_custom_call.1} parent=1 // loop_header
      %s16 = sphi 0, %s20
      %p17 = scmp.ge.s32.totalorder %s16, 4
      %s26 = sphi 0, %s28
      %s29 = sphi 0, %s26
      %s30 = sphi 0, %s29
      %s46 = sphi 0, %s30
      %s50 = sphi 0, %s50
      %s52 = sphi 0, %s50
      %s53 = sphi 0, %s52
      %s67 = sphi 0, %s53
      %s71 = sphi 0, %s71
      %s73 = sphi 0, %s71
      %s74 = sphi 0, %s73
      %s88 = sphi 0, %s74
      %s94 = sphi 0, %s96
      %s97 = sphi 0, %s94
      %s98 = sphi 0, %s97
      %s114 = sphi 0, %s98
    $region4: #{tpu_custom_call.1} parent=1 // loop_header_branch
      %19 = sbr.rel (%p17) target = $region8
    $region5: #{tpu_custom_call.1} parent=1 // loop_body
      %s21 = ssub.s32 %s16, 1
      %s22 = ssub.s32 %s16, 2
      %s23 = sadd.s32 %s16, 1
      %s24 = ssub.s32 %s16, %s23
      %p25 = scmp.eq.s32.totalorder %s24, 0
      %s27 = sadd.s32 %s26, 1
      %s28 = scalar_select %p25, %s26, %s27
      %p31 = pneg %p25
      %p32 = scmp.eq.s32.totalorder %s16, 1
      %p33 = por %p31, %p32
      %p34 = scmp.ne.s32.totalorder %s26, %s29
      %p35 = scmp.eq.s32.totalorder %s16, 0
      %p36 = por %p34, %p35
      %p37 = scmp.ne.s32.totalorder %s26, %s29
      %p38 = scmp.eq.s32.totalorder %s21, 1
      %p39 = por %p37, %p38
      %p40 = scmp.ne.s32.totalorder %s29, %s30
      %p41 = scmp.eq.s32.totalorder %s21, 0
      %p42 = por %p40, %p41
      %p43 = scmp.ne.s32.totalorder %s29, %s30
      %p44 = scmp.eq.s32.totalorder %s22, 1
      %p45 = por %p43, %p44
      %p47 = scmp.ne.s32.totalorder %s30, %s46
      %p48 = scmp.eq.s32.totalorder %s22, 0
      %p49 = por %p47, %p48
      %s51 = sadd.s32 %s50, 1
      %p54 = scmp.eq.s32.totalorder %s16, 1
      %p55 = scmp.ne.s32.totalorder %s50, %s52
      %p56 = scmp.eq.s32.totalorder %s16, 0
      %p57 = por %p55, %p56
      %p58 = scmp.ne.s32.totalorder %s50, %s52
      %p59 = scmp.eq.s32.totalorder %s21, 1
      %p60 = por %p58, %p59
      %p61 = scmp.ne.s32.totalorder %s52, %s53
      %p62 = scmp.eq.s32.totalorder %s21, 0
      %p63 = por %p61, %p62
      %p64 = scmp.ne.s32.totalorder %s52, %s53
      %p65 = scmp.eq.s32.totalorder %s22, 1
      %p66 = por %p64, %p65
      %p68 = scmp.ne.s32.totalorder %s53, %s67
      %p69 = scmp.eq.s32.totalorder %s22, 0
      %p70 = por %p68, %p69
      %s72 = sadd.s32 %s71, 1
      %p75 = scmp.eq.s32.totalorder %s16, 1
      %p76 = scmp.ne.s32.totalorder %s71, %s73
      %p77 = scmp.eq.s32.totalorder %s16, 0
      %p78 = por %p76, %p77
      %p79 = scmp.ne.s32.totalorder %s71, %s73
      %p80 = scmp.eq.s32.totalorder %s21, 1
      %p81 = por %p79, %p80
      %p82 = scmp.ne.s32.totalorder %s73, %s74
      %p83 = scmp.eq.s32.totalorder %s21, 0
      %p84 = por %p82, %p83
      %p85 = scmp.ne.s32.totalorder %s73, %s74
      %p86 = scmp.eq.s32.totalorder %s22, 1
      %p87 = por %p85, %p86
      %p89 = scmp.ne.s32.totalorder %s74, %s88
      %p90 = scmp.eq.s32.totalorder %s22, 0
      %p91 = por %p89, %p90
      %s92 = ssub.s32 %s16, %s23
      %p93 = scmp.eq.s32.totalorder %s92, 0
      %s95 = sadd.s32 %s94, 1
      %s96 = scalar_select %p93, %s94, %s95
      %p99 = pneg %p93
      %p100 = scmp.eq.s32.totalorder %s16, 1
      %p101 = por %p99, %p100
      %p102 = scmp.ne.s32.totalorder %s94, %s97
      %p103 = scmp.eq.s32.totalorder %s16, 0
      %p104 = por %p102, %p103
      %p105 = scmp.ne.s32.totalorder %s94, %s97
      %p106 = scmp.eq.s32.totalorder %s21, 1
      %p107 = por %p105, %p106
      %p108 = scmp.ne.s32.totalorder %s97, %s98
      %p109 = scmp.eq.s32.totalorder %s21, 0
      %p110 = por %p108, %p109
      %p111 = scmp.ne.s32.totalorder %s97, %s98
      %p112 = scmp.eq.s32.totalorder %s22, 1
      %p113 = por %p111, %p112
      %p115 = scmp.ne.s32.totalorder %s98, %s114
      %p116 = scmp.eq.s32.totalorder %s22, 0
      %p117 = por %p115, %p116
      %p118 = scmp.le.s32.totalorder 1, %s16
      %p119 = scmp.lt.s32.totalorder %s16, 3
      %p120 = pnand %p118, %p119
      %p121 = pneg %p120
      // Predicated region
      $region9: #{tpu_custom_call.1} parent=5 // pred_check
        _
      $region10: #{tpu_custom_call.1} parent=5 // pred_check_branch
        %123 = sbr.rel (%p120) target = $region12
      $region11: #{tpu_custom_call.1} parent=5 // pred_region
        %s124 = ssub.s32 %s16, 1
        // Predicated region
        $region13: #{tpu_custom_call.1} parent=11 // pred_check
          %p125 = pneg %p63
        $region14: #{tpu_custom_call.1} parent=11 // pred_check_branch
          %127 = sbr.rel (%p125) target = $region16
        $region15: #{tpu_custom_call.1} parent=11 // pred_region
          %129 = vsyncadd [#allocation6], 0
          %s130 = sshll.u32 %s1, 4
          %s131 = int_to_ptr.hbm [resolvable:$true] %s130
          %s132 = sshll.u32 [#allocation5], 4
          %s133 = int_to_ptr.vmem [resolvable:$true] %s132
          %138 = dma.hbm_to_vmem [thread:$0]  %s131, 512, %s133, [#allocation6], 128, 128, 8
        $region16: #{tpu_custom_call.1} parent=11 // pred_fallthru
          _
        // Predicated region
        $region17: #{tpu_custom_call.1} parent=11 // pred_check
          %p139 = pneg %p84
        $region18: #{tpu_custom_call.1} parent=11 // pred_check_branch
          %141 = sbr.rel (%p139) target = $region20
        $region19: #{tpu_custom_call.1} parent=11 // pred_region
          _
        $region20: #{tpu_custom_call.1} parent=11 // pred_fallthru
          _
      $region12: #{tpu_custom_call.1} parent=5 // pred_fallthru
        _
      %p142 = scmp.lt.s32.totalorder %s16, 2
      // Predicated region
      $region21: #{tpu_custom_call.1} parent=5 // pred_check
        %p143 = pneg %p142
      $region22: #{tpu_custom_call.1} parent=5 // pred_check_branch
        %145 = sbr.rel (%p143) target = $region24
      $region23: #{tpu_custom_call.1} parent=5 // pred_region
        // Predicated region
        $region25: #{tpu_custom_call.1} parent=23 // pred_check
          %p146 = pneg %p36
        $region26: #{tpu_custom_call.1} parent=23 // pred_check_branch
          %148 = sbr.rel (%p146) target = $region28
        $region27: #{tpu_custom_call.1} parent=23 // pred_region
          %s149 = sand.u32 %s26, 1
          %s150 = scalar_lea.sflag [#allocation3], %s149
          %s151 = sand.u32 %s26, 1
          %s152 = smul.addr %s151, 8
          %s153 = scalar_lea.vmem [#allocation2], %s152
          %155 = vsyncadd %s150, 0
          %s156 = smul.addr %s16, 8
          %s157 = scalar_lea.hbm %s0, %s156
          %s159 = sshll.u32 %s157, 4
          %s160 = int_to_ptr.hbm [resolvable:$true] %s159
          %s161 = sshll.u32 %s153, 4
          %s162 = int_to_ptr.vmem [resolvable:$true] %s161
          %164 = dma.hbm_to_vmem [thread:$0]  %s160, 128, %s162, %s150
        $region28: #{tpu_custom_call.1} parent=23 // pred_fallthru
          _
      $region24: #{tpu_custom_call.1} parent=5 // pred_fallthru
        _
      %p165 = scmp.le.s32.totalorder 1, %s16
      %p166 = scmp.lt.s32.totalorder %s16, 3
      %p167 = pnand %p165, %p166
      %p168 = pneg %p167
      // Predicated region
      $region29: #{tpu_custom_call.1} parent=5 // pred_check
        _
      $region30: #{tpu_custom_call.1} parent=5 // pred_check_branch
        %170 = sbr.rel (%p167) target = $region32
      $region31: #{tpu_custom_call.1} parent=5 // pred_region
        %s171 = ssub.s32 %s16, 1
        %s172 = sand.u32 %s29, 1
        %s173 = scalar_lea.sflag [#allocation3], %s172
        %s174 = sand.u32 %s29, 1
        %s175 = smul.addr %s174, 8
        %s176 = scalar_lea.vmem [#allocation2], %s175
        // Predicated region
        $region33: #{tpu_custom_call.1} parent=31 // pred_check
          %p177 = pneg %p42
        $region34: #{tpu_custom_call.1} parent=31 // pred_check_branch
          %179 = sbr.rel (%p177) target = $region36
        $region35: #{tpu_custom_call.1} parent=31 // pred_region
          %181 = dma.done %s173, 128
        $region36: #{tpu_custom_call.1} parent=31 // pred_fallthru
          _
        // Predicated region
        $region37: #{tpu_custom_call.1} parent=31 // pred_check
          %p182 = pneg %p63
        $region38: #{tpu_custom_call.1} parent=31 // pred_check_branch
          %184 = sbr.rel (%p182) target = $region40
        $region39: #{tpu_custom_call.1} parent=31 // pred_region
          %186 = dma.done [#allocation6], 512
        $region40: #{tpu_custom_call.1} parent=31 // pred_fallthru
          _
        %s187 = sand.u32 %s29, 1
        %s188 = scalar_lea.sflag [#allocation3], %s187
        %s189 = sand.u32 %s29, 1
        %s190 = smul.addr %s189, 8
        %s191 = scalar_lea.vmem [#allocation2], %s190
        %p192 = pneg %p42
        %p193 = pneg %p39
        %p194 = pneg %p63
        %p195 = pneg %p60
        %p196 = pneg %p84
        %p197 = pneg %p81
        %p198 = pneg %p110
        %p199 = pneg %p107
        %s200 = sand.u32 %s97, 1
        %s201 = scalar_lea.sflag [#allocation4], %s200
        %s202 = sand.u32 %s97, 1
        %s203 = smul.addr %s202, 8
        %s204 = scalar_lea.vmem [#allocation7], %s203
        %v205 = vld [vmem:[%s176] sm:$0xff]
        %v206 = vld [vmem:[#allocation5] sm:$0xff]
        %v207 = vld [vmem:[#allocation5 + $0x8] sm:$0xff]
        %v208 = vld [vmem:[#allocation5 + $0x10] sm:$0xff]
        %v209 = vld [vmem:[#allocation5 + $0x18] sm:$0xff]
        %v210 = vld [vmem:[%s2] sm:$0x1]
        %v212 = vperm.slane %v210, 0
        %vm214 = vcmask 261120
        %v216 = vsel %vm214, %v205, 0
        %218 = vmatpush.msra.mxu0 0.0
        %219 = vmatpush.msra.mxu0 0.0
        %220 = vmatpush.msra.mxu0 0.0
        %221 = vmatpush.msra.mxu0 0.0
        %222 = vmatpush.msra.mxu0 0.0
        %223 = vmatpush.msra.mxu0 0.0
        %224 = vmatpush.msra.mxu0 0.0
        %225 = vmatpush.msra.mxu0 0.0
        %226 = vmatpush.msra.mxu0 0.0
        %227 = vmatpush.msra.mxu0 0.0
        %228 = vmatpush.msra.mxu0 0.0
        %229 = vmatpush.msra.mxu0 0.0
        %230 = vmatpush.msra.mxu0 %v209
        %231 = vmatpush.msra.mxu0 %v208
        %232 = vmatpush.msra.mxu0 %v207
        %233 = vmatpush.msra.mxu0 %v206
        %234 = vmatmul.f32.gmra.mxu0 %v216
        %v235 = vpop.f32.mrf.mxu0
        %v236 = vadd.f32 %v212, %v235
        %237 = vdwg.mxu0
        %v238 = vmul.f32 %v236, 0.35355338
        %240 = vrot.lane.b32.xlu0 %v236, 96
        %v241 = vpop.permute.xlu0 %240
        %vm242 = vcmask 64512
        %v244 = vsel %vm242, %v238, 0
        %v246 = vsel %vm242, %v241, 0
        %248 = vmatpush.xpose.msra.mxu0 0.0
        %249 = vmatpush.xpose.msra.mxu0 0.0
        %250 = vmatpush.xpose.msra.mxu0 0.0
        %251 = vmatpush.xpose.msra.mxu0 0.0
        %252 = vmatpush.xpose.msra.mxu0 0.0
        %253 = vmatpush.xpose.msra.mxu0 0.0
        %254 = vmatpush.xpose.msra.mxu0 0.0
        %255 = vmatpush.xpose.msra.mxu0 0.0
        %256 = vmatpush.xpose.msra.mxu0 0.0
        %257 = vmatpush.xpose.msra.mxu0 0.0
        %258 = vmatpush.xpose.msra.mxu0 0.0
        %259 = vmatpush.xpose.msra.mxu0 0.0
        %260 = vmatpush.xpose.msra.mxu0 0.0
        %261 = vmatpush.xpose.msra.mxu0 0.0
        %262 = vmatpush.xpose.msra.mxu0 0.0
        %263 = vmatpush.xpose.msra.mxu0 %v246
        %264 = vmatmul.f32.gmra.mxu0 %v244
        %v265 = vpop.f32.mrf.mxu0
        %v266 = vadd.f32 0.0, %v265
        %267 = vdwg.mxu0
        %v268 = vsel %vm242, %v266, -inf
        %269 = vmax.xlane.f32.xlu0 %v268
        %v270 = vpop.xlane.xlu0 %269
        %v271 = vsub.f32 %v266, %v270
        %v272 = vmul.f32 %v271, 1.442695
        %v273 = vpow.pop %v272
        %v274 = vsel %vm242, %v273, 0.0
        %275 = vadd.xlane.f32.xlu0 %v274
        %v276 = vpop.xlane.xlu0 %275
        %v277 = vrcp.pop %v276
        %v278 = vmul.f32 %v273, %v277
        %279 = vrot.lane.b32.xlu0 %v236, 64
        %v280 = vpop.permute.xlu0 %279
        %v283 = vsel %vm242, %v278, 0
        %285 = vmatpush.msra.mxu0 0.0
        %286 = vmatpush.msra.mxu0 0.0
        %287 = vmatpush.msra.mxu0 0.0
        %288 = vmatpush.msra.mxu0 0.0
        %289 = vmatpush.msra.mxu0 0.0
        %290 = vmatpush.msra.mxu0 0.0
        %291 = vmatpush.msra.mxu0 0.0
        %292 = vmatpush.msra.mxu0 0.0
        %293 = vmatpush.msra.mxu0 0.0
        %294 = vmatpush.msra.mxu0 0.0
        %295 = vmatpush.msra.mxu0 0.0
        %296 = vmatpush.msra.mxu0 0.0
        %297 = vmatpush.msra.mxu0 0.0
        %298 = vmatpush.msra.mxu0 0.0
        %299 = vmatpush.msra.mxu0 0.0
        %300 = vmatpush.msra.mxu0 %v280
        %301 = vmatmul.f32.gmra.mxu0 %v283
        %v302 = vpop.f32.mrf.mxu0
        %v303 = vadd.f32 0.0, %v302
        %304 = vdwg.mxu0
        %305 = vrot.lane.b32.xlu0 %v238, 120
        %v306 = vpop.permute.xlu0 %305
        %307 = vrot.lane.b32.xlu0 %v236, 88
        %v308 = vpop.permute.xlu0 %307
        %v309 = vsel %vm242, %v306, 0
        %v311 = vsel %vm242, %v308, 0
        %313 = vmatpush.xpose.msra.mxu0 0.0
        %314 = vmatpush.xpose.msra.mxu0 0.0
        %315 = vmatpush.xpose.msra.mxu0 0.0
        %316 = vmatpush.xpose.msra.mxu0 0.0
        %317 = vmatpush.xpose.msra.mxu0 0.0
        %318 = vmatpush.xpose.msra.mxu0 0.0
        %319 = vmatpush.xpose.msra.mxu0 0.0
        %320 = vmatpush.xpose.msra.mxu0 0.0
        %321 = vmatpush.xpose.msra.mxu0 0.0
        %322 = vmatpush.xpose.msra.mxu0 0.0
        %323 = vmatpush.xpose.msra.mxu0 0.0
        %324 = vmatpush.xpose.msra.mxu0 0.0
        %325 = vmatpush.xpose.msra.mxu0 0.0
        %326 = vmatpush.xpose.msra.mxu0 0.0
        %327 = vmatpush.xpose.msra.mxu0 0.0
        %328 = vmatpush.xpose.msra.mxu0 %v311
        %329 = vmatmul.f32.gmra.mxu0 %v309
        %v330 = vpop.f32.mrf.mxu0
        %v331 = vadd.f32 0.0, %v330
        %332 = vdwg.mxu0
        %v333 = vsel %vm242, %v331, -inf
        %334 = vmax.xlane.f32.xlu0 %v333
        %v335 = vpop.xlane.xlu0 %334
        %v336 = vsub.f32 %v331, %v335
        %v337 = vmul.f32 %v336, 1.442695
        %v338 = vpow.pop %v337
        %v339 = vsel %vm242, %v338, 0.0
        %340 = vadd.xlane.f32.xlu0 %v339
        %v341 = vpop.xlane.xlu0 %340
        %v342 = vrcp.pop %v341
        %v343 = vmul.f32 %v338, %v342
        %344 = vrot.lane.b32.xlu0 %v236, 56
        %v345 = vpop.permute.xlu0 %344
        %v348 = vsel %vm242, %v343, 0
        %350 = vmatpush.msra.mxu0 0.0
        %351 = vmatpush.msra.mxu0 0.0
        %352 = vmatpush.msra.mxu0 0.0
        %353 = vmatpush.msra.mxu0 0.0
        %354 = vmatpush.msra.mxu0 0.0
        %355 = vmatpush.msra.mxu0 0.0
        %356 = vmatpush.msra.mxu0 0.0
        %357 = vmatpush.msra.mxu0 0.0
        %358 = vmatpush.msra.mxu0 0.0
        %359 = vmatpush.msra.mxu0 0.0
        %360 = vmatpush.msra.mxu0 0.0
        %361 = vmatpush.msra.mxu0 0.0
        %362 = vmatpush.msra.mxu0 0.0
        %363 = vmatpush.msra.mxu0 0.0
        %364 = vmatpush.msra.mxu0 0.0
        %365 = vmatpush.msra.mxu0 %v345
        %366 = vmatmul.f32.gmra.mxu0 %v348
        %v367 = vpop.f32.mrf.mxu0
        %v368 = vadd.f32 0.0, %v367
        %369 = vdwg.mxu0
        %370 = vrot.lane.b32.xlu0 %v238, 112
        %v371 = vpop.permute.xlu0 %370
        %372 = vrot.lane.b32.xlu0 %v236, 80
        %v373 = vpop.permute.xlu0 %372
        %v374 = vsel %vm242, %v371, 0
        %v376 = vsel %vm242, %v373, 0
        %378 = vmatpush.xpose.msra.mxu0 0.0
        %379 = vmatpush.xpose.msra.mxu0 0.0
        %380 = vmatpush.xpose.msra.mxu0 0.0
        %381 = vmatpush.xpose.msra.mxu0 0.0
        %382 = vmatpush.xpose.msra.mxu0 0.0
        %383 = vmatpush.xpose.msra.mxu0 0.0
        %384 = vmatpush.xpose.msra.mxu0 0.0
        %385 = vmatpush.xpose.msra.mxu0 0.0
        %386 = vmatpush.xpose.msra.mxu0 0.0
        %387 = vmatpush.xpose.msra.mxu0 0.0
        %388 = vmatpush.xpose.msra.mxu0 0.0
        %389 = vmatpush.xpose.msra.mxu0 0.0
        %390 = vmatpush.xpose.msra.mxu0 0.0
        %391 = vmatpush.xpose.msra.mxu0 0.0
        %392 = vmatpush.xpose.msra.mxu0 0.0
        %393 = vmatpush.xpose.msra.mxu0 %v376
        %394 = vmatmul.f32.gmra.mxu0 %v374
        %v395 = vpop.f32.mrf.mxu0
        %v396 = vadd.f32 0.0, %v395
        %397 = vdwg.mxu0
        %v398 = vsel %vm242, %v396, -inf
        %399 = vmax.xlane.f32.xlu0 %v398
        %v400 = vpop.xlane.xlu0 %399
        %v401 = vsub.f32 %v396, %v400
        %v402 = vmul.f32 %v401, 1.442695
        %v403 = vpow.pop %v402
        %v404 = vsel %vm242, %v403, 0.0
        %405 = vadd.xlane.f32.xlu0 %v404
        %v406 = vpop.xlane.xlu0 %405
        %v407 = vrcp.pop %v406
        %v408 = vmul.f32 %v403, %v407
        %409 = vrot.lane.b32.xlu0 %v236, 48
        %v410 = vpop.permute.xlu0 %409
        %v413 = vsel %vm242, %v408, 0
        %415 = vmatpush.msra.mxu0 0.0
        %416 = vmatpush.msra.mxu0 0.0
        %417 = vmatpush.msra.mxu0 0.0
        %418 = vmatpush.msra.mxu0 0.0
        %419 = vmatpush.msra.mxu0 0.0
        %420 = vmatpush.msra.mxu0 0.0
        %421 = vmatpush.msra.mxu0 0.0
        %422 = vmatpush.msra.mxu0 0.0
        %423 = vmatpush.msra.mxu0 0.0
        %424 = vmatpush.msra.mxu0 0.0
        %425 = vmatpush.msra.mxu0 0.0
        %426 = vmatpush.msra.mxu0 0.0
        %427 = vmatpush.msra.mxu0 0.0
        %428 = vmatpush.msra.mxu0 0.0
        %429 = vmatpush.msra.mxu0 0.0
        %430 = vmatpush.msra.mxu0 %v410
        %431 = vmatmul.f32.gmra.mxu0 %v413
        %v432 = vpop.f32.mrf.mxu0
        %v433 = vadd.f32 0.0, %v432
        %434 = vdwg.mxu0
        %435 = vrot.lane.b32.xlu0 %v238, 104
        %v436 = vpop.permute.xlu0 %435
        %437 = vrot.lane.b32.xlu0 %v236, 72
        %v438 = vpop.permute.xlu0 %437
        %v439 = vsel %vm242, %v436, 0
        %v441 = vsel %vm242, %v438, 0
        %443 = vmatpush.xpose.msra.mxu0 0.0
        %444 = vmatpush.xpose.msra.mxu0 0.0
        %445 = vmatpush.xpose.msra.mxu0 0.0
        %446 = vmatpush.xpose.msra.mxu0 0.0
        %447 = vmatpush.xpose.msra.mxu0 0.0
        %448 = vmatpush.xpose.msra.mxu0 0.0
        %449 = vmatpush.xpose.msra.mxu0 0.0
        %450 = vmatpush.xpose.msra.mxu0 0.0
        %451 = vmatpush.xpose.msra.mxu0 0.0
        %452 = vmatpush.xpose.msra.mxu0 0.0
        %453 = vmatpush.xpose.msra.mxu0 0.0
        %454 = vmatpush.xpose.msra.mxu0 0.0
        %455 = vmatpush.xpose.msra.mxu0 0.0
        %456 = vmatpush.xpose.msra.mxu0 0.0
        %457 = vmatpush.xpose.msra.mxu0 0.0
        %458 = vmatpush.xpose.msra.mxu0 %v441
        %459 = vmatmul.f32.gmra.mxu0 %v439
        %v460 = vpop.f32.mrf.mxu0
        %v461 = vadd.f32 0.0, %v460
        %462 = vdwg.mxu0
        %v463 = vsel %vm242, %v461, -inf
        %464 = vmax.xlane.f32.xlu0 %v463
        %v465 = vpop.xlane.xlu0 %464
        %v466 = vsub.f32 %v461, %v465
        %v467 = vmul.f32 %v466, 1.442695
        %v468 = vpow.pop %v467
        %v469 = vsel %vm242, %v468, 0.0
        %470 = vadd.xlane.f32.xlu0 %v469
        %v471 = vpop.xlane.xlu0 %470
        %v472 = vrcp.pop %v471
        %v473 = vmul.f32 %v468, %v472
        %474 = vrot.lane.b32.xlu0 %v236, 40
        %v475 = vpop.permute.xlu0 %474
        %v478 = vsel %vm242, %v473, 0
        %480 = vmatpush.msra.mxu0 0.0
        %481 = vmatpush.msra.mxu0 0.0
        %482 = vmatpush.msra.mxu0 0.0
        %483 = vmatpush.msra.mxu0 0.0
        %484 = vmatpush.msra.mxu0 0.0
        %485 = vmatpush.msra.mxu0 0.0
        %486 = vmatpush.msra.mxu0 0.0
        %487 = vmatpush.msra.mxu0 0.0
        %488 = vmatpush.msra.mxu0 0.0
        %489 = vmatpush.msra.mxu0 0.0
        %490 = vmatpush.msra.mxu0 0.0
        %491 = vmatpush.msra.mxu0 0.0
        %492 = vmatpush.msra.mxu0 0.0
        %493 = vmatpush.msra.mxu0 0.0
        %494 = vmatpush.msra.mxu0 0.0
        %495 = vmatpush.msra.mxu0 %v475
        %496 = vmatmul.f32.gmra.mxu0 %v478
        %v497 = vpop.f32.mrf.mxu0
        %v498 = vadd.f32 0.0, %v497
        %499 = vdwg.mxu0
        %501 = vrot.lane.b32.xlu0 %v368, 8
        %v502 = vpop.permute.xlu0 %501
        %505 = vrot.lane.b32.xlu0 %v433, 16
        %v506 = vpop.permute.xlu0 %505
        %509 = vrot.lane.b32.xlu0 %v498, 24
        %v510 = vpop.permute.xlu0 %509
        %v512 = vsel %vm242, %v303, %v502
        %vm513 = vcmask 130048
        %v514 = vsel %vm513, %v512, %v506
        %vm515 = vcmask 195584
        %v516 = vsel %vm515, %v514, %v510
        %517 = vst.msk [vmem:[%s204] sm:$0xff] %vm214, %v516
        %s518 = sand.u32 %s97, 1
        %s519 = scalar_lea.sflag [#allocation4], %s518
        %s520 = sand.u32 %s97, 1
        %s521 = smul.addr %s520, 8
        %s522 = scalar_lea.vmem [#allocation7], %s521
        // Predicated region
        $region41: #{tpu_custom_call.1} parent=31 // pred_check
          %p523 = pneg %p107
        $region42: #{tpu_custom_call.1} parent=31 // pred_check_branch
          %525 = sbr.rel (%p523) target = $region44
        $region43: #{tpu_custom_call.1} parent=31 // pred_region
          %527 = vsyncadd %s519, 0
          %s528 = smul.addr %s21, 8
          %s529 = scalar_lea.hbm %s3, %s528
          %s531 = sshll.u32 %s522, 4
          %s532 = int_to_ptr.vmem [resolvable:$true] %s531
          %s533 = sshll.u32 %s529, 4
          %s534 = int_to_ptr.hbm [resolvable:$true] %s533
          %536 = dma.vmem_to_hbm [thread:$0]  %s532, 128, %s534, %s519
        $region44: #{tpu_custom_call.1} parent=31 // pred_fallthru
          _
      $region32: #{tpu_custom_call.1} parent=5 // pred_fallthru
        _
      %p537 = scmp.le.s32.totalorder 2, %s16
      // Predicated region
      $region45: #{tpu_custom_call.1} parent=5 // pred_check
        %p538 = pneg %p537
      $region46: #{tpu_custom_call.1} parent=5 // pred_check_branch
        %540 = sbr.rel (%p538) target = $region48
      $region47: #{tpu_custom_call.1} parent=5 // pred_region
        %s541 = ssub.s32 %s16, 2
        // Predicated region
        $region49: #{tpu_custom_call.1} parent=47 // pred_check
          %p542 = pneg %p113
        $region50: #{tpu_custom_call.1} parent=47 // pred_check_branch
          %544 = sbr.rel (%p542) target = $region52
        $region51: #{tpu_custom_call.1} parent=47 // pred_region
          %s545 = sand.u32 %s98, 1
          %s546 = scalar_lea.sflag [#allocation4], %s545
          %s547 = sand.u32 %s98, 1
          %s548 = smul.addr %s547, 8
          %s549 = scalar_lea.vmem [#allocation7], %s548
          %551 = dma.done %s546, 128
        $region52: #{tpu_custom_call.1} parent=47 // pred_fallthru
          _
      $region48: #{tpu_custom_call.1} parent=5 // pred_fallthru
        _
    $region6: #{tpu_custom_call.1} parent=1 // loop_footer
      %s20 = sadd.s32 1, %s16
    $region7: #{tpu_custom_call.1} parent=1 // loop_footer_branch
      %15 = sbr.rel target = $region3
    $region8: #{tpu_custom_call.1} parent=1 // loop_exit
      _
    %552 = vsyncpa [#allocation3], 1
    %s553 = scalar_lea.sflag [#allocation3], 1
    %554 = vsyncpa %s553, 1
    %555 = vsyncpa [#allocation6], 1
    %556 = vsyncpa [#allocation4], 1
    %s557 = scalar_lea.sflag [#allocation4], 1
    %558 = vsyncpa %s557, 1

</llo_original>
